<compile_context>
chip_gen: v7x
topology: tpu7x:2x2x1
jax: 0.10.0
libtpu: 0.0.40
codegen_flags: <defaults>
</compile_context>

<pallas_src>
import jax
import jax.numpy as jnp
import numpy as np
from jax.experimental import pallas as pl
from jax.experimental.pallas import tpu as pltpu


def _yolo_decode_kernel(x_ref, scale_ref, sign_ref, off_ref, out_ref):
    """Decode TB (sample, anchor) rows in channel-major layout.

    x_ref:     (TB, C5, GG)  raw network outputs (input dtype).
    scale_ref: (TB, C5, 1)   multiplier applied last: stride for tx/ty,
                             pixel-space anchors for tw/th, 1 for conf/class.
    sign_ref:  (1, C5, 1)    +1 for exp channels (tw, th), -1 for sigmoid ones.
    off_ref:   (1, C5, GG)   additive grid offsets (gx on ch0, gy on ch1, 0 else).
    out_ref:   (TB, C5, GG)  decoded output, f32.
    """
    p = x_ref[...].astype(jnp.float32)                    # (TB, C5, GG)
    sign = sign_ref[...]                                  # (1, C5, 1)
    # One shared exponential: exp(p) on tw/th rows, exp(-p) on sigmoid rows.
    e = jnp.exp(p * sign)
    sig = pl.reciprocal(1.0 + e)                          # sigmoid(p) on sigmoid rows
    # True select: the discarded branch may hold inf but is never combined.
    val = jnp.where(sign > 0, e, sig)
    # (sigmoid + grid) * stride  /  exp * anchor  /  sigmoid * 1
    out_ref[...] = ((val + off_ref[...]) * scale_ref[...]).astype(out_ref.dtype)


def yolo_layer_forward(x, anchors, num_classes, img_dim=416, torch_layout=True):
    """Pallas implementation of YOLOLayer.forward(x, targets=None).

    x: (N, A*(num_classes+5), G, G), NCHW like the PyTorch module.
    Returns (output, 0); output is (N, A*G*G, 5+num_classes) when
    torch_layout=True (default), else channel-major (N, A, 5+num_classes, G, G).
    """
    N, C, G, G2 = x.shape
    assert G == G2
    A = len(anchors)
    C5 = num_classes + 5
    assert C == A * C5
    GG = G * G
    stride = float(img_dim) / float(G)
    rows = N * A

    # (N, A*C5, G, G) -> (N*A, C5, GG): contiguous view (no HBM pass, no pad).
    xr = x.reshape(rows, C5, GG)

    # Row-batch size: ~4 MiB combined (input + f32 output) per step so the
    # double-buffered working set (~8-9 MiB) fits every generation's scoped
    # VMEM, and at least 2 grid steps so the "parallel" axis can use both
    # v7x TensorCores.
    bytes_per_row = C5 * GG * (x.dtype.itemsize + 4)
    TB = int(max(1, min(rows, (4 * 1024 * 1024) // max(1, bytes_per_row))))
    if rows >= 2:
        TB = min(TB, rows // 2)
    while rows % TB:                 # largest divisor of rows <= cap: no row pad
        TB -= 1
    num_blocks = rows // TB

    anchors_np = np.asarray(anchors, dtype=np.float32)      # pixel units
    stride_f = np.float32(stride)

    # Per-(row, channel) multiplicative scale (applied after the additive grid
    # offset). Row index = n*A + a, so anchor values tile across samples.
    scale_np = np.ones((rows, C5, 1), dtype=np.float32)
    scale_np[:, 0, 0] = stride_f
    scale_np[:, 1, 0] = stride_f
    scale_np[:, 2, 0] = np.tile((anchors_np[:, 0] / stride_f) * stride_f, N)
    scale_np[:, 3, 0] = np.tile((anchors_np[:, 1] / stride_f) * stride_f, N)

    # +1 on exp channels (tw, th), -1 elsewhere -> drives exp(p * sign).
    sign_np = np.full((1, C5, 1), -1.0, dtype=np.float32)
    sign_np[0, 2, 0] = 1.0
    sign_np[0, 3, 0] = 1.0

    # Additive grid offsets (unscaled; stride lives in scale so the final
    # association matches torch: (sigmoid + grid) * stride).  Constant
    # index_map -> fetched once, resident across the whole grid.
    off_np = np.zeros((1, C5, GG), dtype=np.float32)
    off_np[0, 0, :] = np.tile(np.arange(G, dtype=np.float32), G)      # grid_x
    off_np[0, 1, :] = np.repeat(np.arange(G, dtype=np.float32), G)    # grid_y

    elems = rows * C5 * GG
    cost = pl.CostEstimate(
        flops=4 * elems,
        transcendentals=2 * elems,
        bytes_accessed=elems * (x.dtype.itemsize + 4)
        + rows * C5 * 4 + C5 * GG * 4 + 2 * C5 * 4,
    )

    out = pl.pallas_call(
        _yolo_decode_kernel,
        out_shape=jax.ShapeDtypeStruct((rows, C5, GG), jnp.float32),
        grid=(num_blocks,),
        in_specs=[
            pl.BlockSpec((TB, C5, GG), lambda i: (i, 0, 0)),   # predictions
            pl.BlockSpec((TB, C5, 1), lambda i: (i, 0, 0)),    # scale table
            pl.BlockSpec((1, C5, 1), lambda i: (0, 0, 0)),     # sign table
            pl.BlockSpec((1, C5, GG), lambda i: (0, 0, 0)),    # grid offsets
        ],
        out_specs=pl.BlockSpec((TB, C5, GG), lambda i: (i, 0, 0)),
        compiler_params=pltpu.CompilerParams(
            dimension_semantics=("parallel",),
            vmem_limit_bytes=32 * 1024 * 1024),
        cost_estimate=cost,
    )(xr, jnp.asarray(scale_np), jnp.asarray(sign_np), jnp.asarray(off_np))

    if not torch_layout:
        # Channel-major layout: skips the output-transpose HBM pass when the
        # downstream consumer can take it.
        return out.reshape(N, A, C5, G, G), 0
    # PyTorch-compatible (N, A*G*G, 5+num_classes) via one XLA transpose.
    output = jnp.transpose(out, (0, 2, 1)).reshape(N, A * GG, C5)
    return output, 0


def yolo_layer_reference(x, anchors, num_classes, img_dim=416):
    """Pure-JAX reference mirroring the PyTorch forward (targets=None)."""
    N, C, G, _ = x.shape
    A = len(anchors)
    C5 = num_classes + 5
    stride = float(img_dim) / float(G)
    pred = x.reshape(N, A, C5, G, G).transpose(0, 1, 3, 4, 2)   # (N,A,G,G,C5)
    sx = jax.nn.sigmoid(pred[..., 0])
    sy = jax.nn.sigmoid(pred[..., 1])
    w = pred[..., 2]
    h = pred[..., 3]
    conf = jax.nn.sigmoid(pred[..., 4])
    cls = jax.nn.sigmoid(pred[..., 5:])
    grid_x = jnp.arange(G, dtype=jnp.float32).reshape(1, 1, 1, G)
    grid_y = jnp.arange(G, dtype=jnp.float32).reshape(1, 1, G, 1)
    aw = (jnp.asarray(anchors, jnp.float32)[:, 0] / stride).reshape(1, A, 1, 1)
    ah = (jnp.asarray(anchors, jnp.float32)[:, 1] / stride).reshape(1, A, 1, 1)
    boxes = jnp.stack(
        [sx + grid_x, sy + grid_y, jnp.exp(w) * aw, jnp.exp(h) * ah], axis=-1)
    out = jnp.concatenate(
        [boxes.reshape(N, -1, 4) * stride,
         conf.reshape(N, -1, 1),
         cls.reshape(N, -1, num_classes)], axis=-1)
    return out


if __name__ == "__main__":
    def _check(N, G, num_classes, anchors, img_dim):
        A = len(anchors)
        C5 = num_classes + 5
        C = A * C5
        key = jax.random.PRNGKey(0)
        x = jax.random.normal(key, (N, C, G, G), dtype=jnp.float32)

        out, loss = yolo_layer_forward(x, anchors, num_classes, img_dim=img_dim)
        out = jax.block_until_ready(out)
        ref = yolo_layer_reference(x, anchors, num_classes, img_dim=img_dim)
        np.testing.assert_allclose(np.asarray(out), np.asarray(ref),
                                   rtol=1e-5, atol=1e-5)
        assert out.shape == (N, A * G * G, C5)
        assert loss == 0

        # Channel-major fast path (no output-transpose HBM pass).
        out_cm, _ = yolo_layer_forward(x, anchors, num_classes,
                                       img_dim=img_dim, torch_layout=False)
        out_cm = jax.block_until_ready(out_cm)
        ref_cm = np.transpose(np.asarray(ref).reshape(N, A, G, G, C5),
                              (0, 1, 4, 2, 3))
        np.testing.assert_allclose(np.asarray(out_cm), ref_cm,
                                   rtol=1e-5, atol=1e-5)

    anchors = [(10.0, 13.0), (16.0, 30.0), (33.0, 23.0)]
    # Aligned config: GG = 256 (x128), C5 = 8 (x8) -> fully dense stores.
    _check(N=2, G=16, num_classes=3, anchors=anchors, img_dim=416)
    # Misaligned "real YOLO"-style config: G=13 -> GG=169, C5=7 -> exercises
    # the unpadded full-extent block path (masked tail vreg, no extra passes).
    _check(N=2, G=13, num_classes=2, anchors=anchors, img_dim=416)
    print("KERNEL_OK")
</pallas_src>

<mosaic_0001>
module attributes {stable_mosaic.version = 11 : i64} {
  func.func @_yolo_decode_kernel(%arg0: i32, %arg1: memref<3x8x256xf32, #tpu.memory_space<vmem>>, %arg2: memref<3x8x1xf32, #tpu.memory_space<vmem>>, %arg3: memref<1x8x1xf32, #tpu.memory_space<vmem>>, %arg4: memref<1x8x256xf32, #tpu.memory_space<vmem>>, %arg5: memref<3x8x256xf32, #tpu.memory_space<vmem>>) attributes {dimension_semantics = [#tpu.dimension_semantics<parallel>], iteration_bounds = array<i64: 2>, scalar_prefetch = 0 : i64, scratch_operands = 0 : i64, tpu.core_type = #tpu.core_type<tc>, window_params = [{transform_indices = @transform_0, window_bounds = array<i64: 3, 8, 256>}, {transform_indices = @transform_1, window_bounds = array<i64: 3, 8, 1>}, {pipeline_mode = #tpu.pipeline_mode<synchronous>, transform_indices = @transform_2, window_bounds = array<i64: 1, 8, 1>}, {pipeline_mode = #tpu.pipeline_mode<synchronous>, transform_indices = @transform_3, window_bounds = array<i64: 1, 8, 256>}, {transform_indices = @transform_4, window_bounds = array<i64: 3, 8, 256>}]} {
    %c0 = arith.constant 0 : index
    %c0_0 = arith.constant 0 : index
    %c0_1 = arith.constant 0 : index
    %0 = vector.load %arg1[%c0, %c0_0, %c0_1] : memref<3x8x256xf32, #tpu.memory_space<vmem>>, vector<3x8x256xf32>
    %c0_2 = arith.constant 0 : index
    %c0_3 = arith.constant 0 : index
    %c0_4 = arith.constant 0 : index
    %1 = vector.load %arg3[%c0_2, %c0_3, %c0_4] : memref<1x8x1xf32, #tpu.memory_space<vmem>>, vector<1x8x1xf32>
    %2 = vector.broadcast %1 : vector<1x8x1xf32> to vector<3x8x256xf32>
    %3 = arith.mulf %0, %2 : vector<3x8x256xf32>
    %4 = math.exp %3 : vector<3x8x256xf32>
    %cst = arith.constant 1.000000e+00 : f32
    %5 = vector.broadcast %cst : f32 to vector<3x8x256xf32>
    %6 = arith.addf %5, %4 : vector<3x8x256xf32>
    %7 = tpu.reciprocal %6 : vector<3x8x256xf32> -> vector<3x8x256xf32>
    %cst_5 = arith.constant 0.000000e+00 : f32
    %8 = vector.broadcast %cst_5 : f32 to vector<1x8x1xf32>
    %9 = arith.cmpf ogt, %1, %8 : vector<1x8x1xf32>
    %10 = vector.shape_cast %9 : vector<1x8x1xi1> to vector<1x8x1xi1>
    %11 = vector.broadcast %10 : vector<1x8x1xi1> to vector<3x8x256xi1>
    %12 = arith.select %11, %4, %7 : vector<3x8x256xi1>, vector<3x8x256xf32>
    %c0_6 = arith.constant 0 : index
    %c0_7 = arith.constant 0 : index
    %c0_8 = arith.constant 0 : index
    %13 = vector.load %arg4[%c0_6, %c0_7, %c0_8] : memref<1x8x256xf32, #tpu.memory_space<vmem>>, vector<1x8x256xf32>
    %14 = vector.broadcast %13 : vector<1x8x256xf32> to vector<3x8x256xf32>
    %15 = arith.addf %12, %14 : vector<3x8x256xf32>
    %c0_9 = arith.constant 0 : index
    %c0_10 = arith.constant 0 : index
    %c0_11 = arith.constant 0 : index
    %16 = vector.load %arg2[%c0_9, %c0_10, %c0_11] : memref<3x8x1xf32, #tpu.memory_space<vmem>>, vector<3x8x1xf32>
    %17 = vector.broadcast %16 : vector<3x8x1xf32> to vector<3x8x256xf32>
    %18 = arith.mulf %15, %17 : vector<3x8x256xf32>
    %c0_12 = arith.constant 0 : index
    %c0_13 = arith.constant 0 : index
    %c0_14 = arith.constant 0 : index
    %19 = vector.load %arg5[%c0_12, %c0_13, %c0_14] : memref<3x8x256xf32, #tpu.memory_space<vmem>>, vector<3x8x256xf32>
    tpu.vector_store %arg5[%c0_12, %c0_13, %c0_14], %18 {strides = array<i32>} : memref<3x8x256xf32, #tpu.memory_space<vmem>>, vector<3x8x256xf32>,
    return
  }
  func.func @transform_0(%arg0: i32) -> (i32, i32, i32) {
    %c0_i32 = arith.constant 0 : i32
    %c0_i32_0 = arith.constant 0 : i32
    %c0_i32_1 = arith.constant 0 : i32
    return %arg0, %c0_i32, %c0_i32_0 : i32, i32, i32
  }
  func.func @transform_1(%arg0: i32) -> (i32, i32, i32) {
    %c0_i32 = arith.constant 0 : i32
    %c0_i32_0 = arith.constant 0 : i32
    %c0_i32_1 = arith.constant 0 : i32
    return %arg0, %c0_i32, %c0_i32_0 : i32, i32, i32
  }
  func.func @transform_2(%arg0: i32) -> (i32, i32, i32) {
    %c0_i32 = arith.constant 0 : i32
    %c0_i32_0 = arith.constant 0 : i32
    %c0_i32_1 = arith.constant 0 : i32
    %c0_i32_2 = arith.constant 0 : i32
    return %c0_i32, %c0_i32_0, %c0_i32_1 : i32, i32, i32
  }
  func.func @transform_3(%arg0: i32) -> (i32, i32, i32) {
    %c0_i32 = arith.constant 0 : i32
    %c0_i32_0 = arith.constant 0 : i32
    %c0_i32_1 = arith.constant 0 : i32
    %c0_i32_2 = arith.constant 0 : i32
    return %c0_i32, %c0_i32_0, %c0_i32_1 : i32, i32, i32
  }
  func.func @transform_4(%arg0: i32) -> (i32, i32, i32) {
    %c0_i32 = arith.constant 0 : i32
    %c0_i32_0 = arith.constant 0 : i32
    %c0_i32_1 = arith.constant 0 : i32
    return %arg0, %c0_i32, %c0_i32_0 : i32, i32, i32
  }
}

</mosaic_0001>

<llo_original>
// kernel: tpu_custom_call.1
$region0: #{tpu_custom_call.1}
  #allocation0 [shape = 'u32[]', space=smem, size = 0x4, offset = 0x4, fixed_abs, tag = 'smem constant byte address 0x4 - core index']
  #allocation1 [shape = 'u32[144,128]{1,0:T(1,128)}', space=vmem, size = 0x12000, scoped, tag = 'internal scratch']
  %s0 = inlined_call_operand.hbm [shape: f32[6,8,256], index: 0, kind: input, shape index: {}]
  %s1 = inlined_call_operand.vmem [shape: f32[6,8,1], index: 1, kind: input, shape index: {}]
  %s2 = inlined_call_operand.vmem [shape: f32[1,8,1], index: 2, kind: input, shape index: {}]
  %s3 = inlined_call_operand.vmem [shape: f32[1,8,256], index: 3, kind: input, shape index: {}]
  %s4 = inlined_call_operand.hbm [shape: f32[6,8,256], index: 4, kind: output, shape index: {}]
  %s5 = sld [smem:[#allocation0]]
  $region53: #{tpu_custom_call.1} parent=0
    _
  %s7 = ssub.s32 1, %s5
  %s8 = scalar_select 0, %s7, %s5
  $region1: #{tpu_custom_call.1} parent=0
    #allocation2 [shape = 'u8[49152]{0}', space=vmem, size = 0xc000, scoped, tag = 'input window, operand 0']
    #allocation3 [shape = 's32[2]{0}', space=sflag, size = 0x8, scoped, tag = 'scoped memory for tpu_custom_call.1']
    #allocation4 [shape = 's32[2]{0}', space=sflag, size = 0x8, scoped, tag = 'scoped memory for tpu_custom_call.1']
    #allocation5 [shape = 'u8[49152]{0}', space=vmem, size = 0xc000, scoped, tag = 'output window, operand 0']
    %9 = vsyncpa [#allocation3], 0
    %s10 = scalar_lea.sflag [#allocation3], 1
    %11 = vsyncpa %s10, 0
    %12 = vsyncpa [#allocation4], 0
    %s13 = scalar_lea.sflag [#allocation4], 1
    %14 = vsyncpa %s13, 0
    loop: start=0, step=1, limit=4
    $region2: #{tpu_custom_call.1} parent=1 // loop_pre_header
      _
    $region3: #{tpu_custom_call.1} parent=1 // loop_header
      %s16 = sphi 0, %s20
      %p17 = scmp.ge.s32.totalorder %s16, 4
      %s26 = sphi 0, %s28
      %s29 = sphi 0, %s26
      %s30 = sphi 0, %s29
      %s46 = sphi 0, %s30
      %s52 = sphi 0, %s54
      %s55 = sphi 0, %s52
      %s56 = sphi 0, %s55
      %s72 = sphi 0, %s56
      %s76 = sphi 0, %s76
      %s78 = sphi 0, %s76
      %s79 = sphi 0, %s78
      %s93 = sphi 0, %s79
      %s97 = sphi 0, %s97
      %s99 = sphi 0, %s97
      %s100 = sphi 0, %s99
      %s114 = sphi 0, %s100
      %s120 = sphi 0, %s122
      %s123 = sphi 0, %s120
      %s124 = sphi 0, %s123
      %s140 = sphi 0, %s124
    $region4: #{tpu_custom_call.1} parent=1 // loop_header_branch
      %19 = sbr.rel (%p17) target = $region8
    $region5: #{tpu_custom_call.1} parent=1 // loop_body
      %s21 = ssub.s32 %s16, 1
      %s22 = ssub.s32 %s16, 2
      %s23 = sadd.s32 %s16, 1
      %s24 = ssub.s32 %s16, %s23
      %p25 = scmp.eq.s32.totalorder %s24, 0
      %s27 = sadd.s32 %s26, 1
      %s28 = scalar_select %p25, %s26, %s27
      %p31 = pneg %p25
      %p32 = scmp.eq.s32.totalorder %s16, 1
      %p33 = por %p31, %p32
      %p34 = scmp.ne.s32.totalorder %s26, %s29
      %p35 = scmp.eq.s32.totalorder %s16, 0
      %p36 = por %p34, %p35
      %p37 = scmp.ne.s32.totalorder %s26, %s29
      %p38 = scmp.eq.s32.totalorder %s21, 1
      %p39 = por %p37, %p38
      %p40 = scmp.ne.s32.totalorder %s29, %s30
      %p41 = scmp.eq.s32.totalorder %s21, 0
      %p42 = por %p40, %p41
      %p43 = scmp.ne.s32.totalorder %s29, %s30
      %p44 = scmp.eq.s32.totalorder %s22, 1
      %p45 = por %p43, %p44
      %p47 = scmp.ne.s32.totalorder %s30, %s46
      %p48 = scmp.eq.s32.totalorder %s22, 0
      %p49 = por %p47, %p48
      %s50 = ssub.s32 %s16, %s23
      %p51 = scmp.eq.s32.totalorder %s50, 0
      %s53 = sadd.s32 %s52, 1
      %s54 = scalar_select %p51, %s52, %s53
      %p57 = pneg %p51
      %p58 = scmp.eq.s32.totalorder %s16, 1
      %p59 = por %p57, %p58
      %p60 = scmp.ne.s32.totalorder %s52, %s55
      %p61 = scmp.eq.s32.totalorder %s16, 0
      %p62 = por %p60, %p61
      %p63 = scmp.ne.s32.totalorder %s52, %s55
      %p64 = scmp.eq.s32.totalorder %s21, 1
      %p65 = por %p63, %p64
      %p66 = scmp.ne.s32.totalorder %s55, %s56
      %p67 = scmp.eq.s32.totalorder %s21, 0
      %p68 = por %p66, %p67
      %p69 = scmp.ne.s32.totalorder %s55, %s56
      %p70 = scmp.eq.s32.totalorder %s22, 1
      %p71 = por %p69, %p70
      %p73 = scmp.ne.s32.totalorder %s56, %s72
      %p74 = scmp.eq.s32.totalorder %s22, 0
      %p75 = por %p73, %p74
      %s77 = sadd.s32 %s76, 1
      %p80 = scmp.eq.s32.totalorder %s16, 1
      %p81 = scmp.ne.s32.totalorder %s76, %s78
      %p82 = scmp.eq.s32.totalorder %s16, 0
      %p83 = por %p81, %p82
      %p84 = scmp.ne.s32.totalorder %s76, %s78
      %p85 = scmp.eq.s32.totalorder %s21, 1
      %p86 = por %p84, %p85
      %p87 = scmp.ne.s32.totalorder %s78, %s79
      %p88 = scmp.eq.s32.totalorder %s21, 0
      %p89 = por %p87, %p88
      %p90 = scmp.ne.s32.totalorder %s78, %s79
      %p91 = scmp.eq.s32.totalorder %s22, 1
      %p92 = por %p90, %p91
      %p94 = scmp.ne.s32.totalorder %s79, %s93
      %p95 = scmp.eq.s32.totalorder %s22, 0
      %p96 = por %p94, %p95
      %s98 = sadd.s32 %s97, 1
      %p101 = scmp.eq.s32.totalorder %s16, 1
      %p102 = scmp.ne.s32.totalorder %s97, %s99
      %p103 = scmp.eq.s32.totalorder %s16, 0
      %p104 = por %p102, %p103
      %p105 = scmp.ne.s32.totalorder %s97, %s99
      %p106 = scmp.eq.s32.totalorder %s21, 1
      %p107 = por %p105, %p106
      %p108 = scmp.ne.s32.totalorder %s99, %s100
      %p109 = scmp.eq.s32.totalorder %s21, 0
      %p110 = por %p108, %p109
      %p111 = scmp.ne.s32.totalorder %s99, %s100
      %p112 = scmp.eq.s32.totalorder %s22, 1
      %p113 = por %p111, %p112
      %p115 = scmp.ne.s32.totalorder %s100, %s114
      %p116 = scmp.eq.s32.totalorder %s22, 0
      %p117 = por %p115, %p116
      %s118 = ssub.s32 %s16, %s23
      %p119 = scmp.eq.s32.totalorder %s118, 0
      %s121 = sadd.s32 %s120, 1
      %s122 = scalar_select %p119, %s120, %s121
      %p125 = pneg %p119
      %p126 = scmp.eq.s32.totalorder %s16, 1
      %p127 = por %p125, %p126
      %p128 = scmp.ne.s32.totalorder %s120, %s123
      %p129 = scmp.eq.s32.totalorder %s16, 0
      %p130 = por %p128, %p129
      %p131 = scmp.ne.s32.totalorder %s120, %s123
      %p132 = scmp.eq.s32.totalorder %s21, 1
      %p133 = por %p131, %p132
      %p134 = scmp.ne.s32.totalorder %s123, %s124
      %p135 = scmp.eq.s32.totalorder %s21, 0
      %p136 = por %p134, %p135
      %p137 = scmp.ne.s32.totalorder %s123, %s124
      %p138 = scmp.eq.s32.totalorder %s22, 1
      %p139 = por %p137, %p138
      %p141 = scmp.ne.s32.totalorder %s124, %s140
      %p142 = scmp.eq.s32.totalorder %s22, 0
      %p143 = por %p141, %p142
      %p144 = scmp.le.s32.totalorder 1, %s16
      %p145 = scmp.lt.s32.totalorder %s16, 3
      %p146 = pnand %p144, %p145
      %p147 = pneg %p146
      // Predicated region
      $region9: #{tpu_custom_call.1} parent=5 // pred_check
        _
      $region10: #{tpu_custom_call.1} parent=5 // pred_check_branch
        %149 = sbr.rel (%p146) target = $region12
      $region11: #{tpu_custom_call.1} parent=5 // pred_region
        %s150 = ssub.s32 %s16, 1
        // Predicated region
        $region13: #{tpu_custom_call.1} parent=11 // pred_check
          %p151 = pneg %p89
        $region14: #{tpu_custom_call.1} parent=11 // pred_check_branch
          %153 = sbr.rel (%p151) target = $region16
        $region15: #{tpu_custom_call.1} parent=11 // pred_region
          _
        $region16: #{tpu_custom_call.1} parent=11 // pred_fallthru
          _
        // Predicated region
        $region17: #{tpu_custom_call.1} parent=11 // pred_check
          %p154 = pneg %p110
        $region18: #{tpu_custom_call.1} parent=11 // pred_check_branch
          %156 = sbr.rel (%p154) target = $region20
        $region19: #{tpu_custom_call.1} parent=11 // pred_region
          _
        $region20: #{tpu_custom_call.1} parent=11 // pred_fallthru
          _
      $region12: #{tpu_custom_call.1} parent=5 // pred_fallthru
        _
      %p157 = scmp.lt.s32.totalorder %s16, 2
      // Predicated region
      $region21: #{tpu_custom_call.1} parent=5 // pred_check
        %p158 = pneg %p157
      $region22: #{tpu_custom_call.1} parent=5 // pred_check_branch
        %160 = sbr.rel (%p158) target = $region24
      $region23: #{tpu_custom_call.1} parent=5 // pred_region
        // Predicated region
        $region25: #{tpu_custom_call.1} parent=23 // pred_check
          %p161 = pneg %p36
        $region26: #{tpu_custom_call.1} parent=23 // pred_check_branch
          %163 = sbr.rel (%p161) target = $region28
        $region27: #{tpu_custom_call.1} parent=23 // pred_region
          %s164 = sand.u32 %s26, 1
          %s165 = scalar_lea.sflag [#allocation3], %s164
          %s166 = sand.u32 %s26, 1
          %s167 = smul.addr %s166, 48
          %s168 = scalar_lea.vmem [#allocation2], %s167
          %s169 = smul.u32 3, %s16
          %s171 = ssub.s32 768, 768
          %172 = vsyncadd %s165, %s171
          %s173 = smul.addr %s169, 2
          %s174 = smul.addr %s173, 128
          %s175 = scalar_lea.hbm %s0, %s174
          %s176 = sshll.u32 %s168, 4
          %s177 = int_to_ptr.vmem [resolvable:$true] %s176
          %182 = dma.hbm_to_vmem [thread:$0]  %s175, 768, %s177, %s165, 256, 256, 16
        $region28: #{tpu_custom_call.1} parent=23 // pred_fallthru
          _
        // Predicated region
        $region29: #{tpu_custom_call.1} parent=23 // pred_check
          %p183 = pneg %p62
        $region30: #{tpu_custom_call.1} parent=23 // pred_check_branch
          %185 = sbr.rel (%p183) target = $region32
        $region31: #{tpu_custom_call.1} parent=23 // pred_region
          %s186 = smul.u32 3, %s16
          %p187 = scmp.lt.s32.totalorder %s186, 5
          %s188 = scalar_select %p187, %s186, 5
          %s189 = smul.addr %s188, 8
          %s190 = scalar_lea.vmem %s1, %s189
          %s191 = smul.u32 3, %s16
        $region32: #{tpu_custom_call.1} parent=23 // pred_fallthru
          _
      $region24: #{tpu_custom_call.1} parent=5 // pred_fallthru
        _
      %p192 = scmp.le.s32.totalorder 1, %s16
      %p193 = scmp.lt.s32.totalorder %s16, 3
      %p194 = pnand %p192, %p193
      %p195 = pneg %p194
      // Predicated region
      $region33: #{tpu_custom_call.1} parent=5 // pred_check
        _
      $region34: #{tpu_custom_call.1} parent=5 // pred_check_branch
        %197 = sbr.rel (%p194) target = $region36
      $region35: #{tpu_custom_call.1} parent=5 // pred_region
        %s198 = ssub.s32 %s16, 1
        %s199 = sand.u32 %s29, 1
        %s200 = scalar_lea.sflag [#allocation3], %s199
        %s201 = sand.u32 %s29, 1
        %s202 = smul.addr %s201, 48
        %s203 = scalar_lea.vmem [#allocation2], %s202
        // Predicated region
        $region37: #{tpu_custom_call.1} parent=35 // pred_check
          %p204 = pneg %p42
        $region38: #{tpu_custom_call.1} parent=35 // pred_check_branch
          %206 = sbr.rel (%p204) target = $region40
        $region39: #{tpu_custom_call.1} parent=35 // pred_region
          %207 = dma.done %s200, 768
        $region40: #{tpu_custom_call.1} parent=35 // pred_fallthru
          _
        %s208 = sand.u32 %s29, 1
        %s209 = scalar_lea.sflag [#allocation3], %s208
        %s210 = sand.u32 %s29, 1
        %s211 = smul.addr %s210, 48
        %s212 = scalar_lea.vmem [#allocation2], %s211
        %p213 = pneg %p42
        %p214 = pneg %p39
        %s215 = smul.u32 3, %s21
        %p216 = scmp.lt.s32.totalorder %s215, 5
        %s217 = scalar_select %p216, %s215, 5
        %s218 = smul.addr %s217, 8
        %s219 = scalar_lea.vmem %s1, %s218
        %p220 = pneg %p68
        %p221 = pneg %p65
        %p222 = pneg %p89
        %p223 = pneg %p86
        %p224 = pneg %p110
        %p225 = pneg %p107
        %p226 = pneg %p136
        %p227 = pneg %p133
        %s228 = sand.u32 %s123, 1
        %s229 = scalar_lea.sflag [#allocation4], %s228
        %s230 = sand.u32 %s123, 1
        %s231 = smul.addr %s230, 48
        %s232 = scalar_lea.vmem [#allocation5], %s231
        %s233 = smul.u32 3, %s21
        %s234 = smul.u32 3, %s21
        %p235 = scmp.lt.s32.totalorder %s234, 5
        %s236 = scalar_select %p235, %s234, 5
        %s237 = smul.addr %s236, 8
        %s238 = scalar_lea.vmem %s1, %s237
        %s239 = smul.u32 3, %s21
        %s240 = smul.u32 3, %s21
        %v241 = vld [vmem:[%s203] sm:$0xff]
        %v242 = vld [vmem:[%s203 + $0x8] sm:$0xff]
        %v243 = vld [vmem:[%s203 + $0x10] sm:$0xff]
        %v244 = vld [vmem:[%s203 + $0x18] sm:$0xff]
        %v245 = vld [vmem:[%s203 + $0x20] sm:$0xff]
        %v246 = vld [vmem:[%s203 + $0x28] sm:$0xff]
        %v247 = vld [vmem:[%s2] sm:$0xff]
        %249 = vset.pattern.permute.xlu0 0
        %250 = vperm.xlu0 %249, %v247
        %v251 = vpop.permute.xlu0 %250
        %v253 = vmul.f32 %v241, %v251
        %v254 = vmul.f32 %v242, %v251
        %v255 = vmul.f32 %v243, %v251
        %v256 = vmul.f32 %v244, %v251
        %v257 = vmul.f32 %v245, %v251
        %v258 = vmul.f32 %v246, %v251
        %v259 = vmul.f32 %v253, 1.442695
        %v260 = vpow.pop %v259
        %v261 = vmul.f32 %v254, 1.442695
        %v262 = vpow.pop %v261
        %v263 = vmul.f32 %v255, 1.442695
        %v264 = vpow.pop %v263
        %v265 = vmul.f32 %v256, 1.442695
        %v266 = vpow.pop %v265
        %v267 = vmul.f32 %v257, 1.442695
        %v268 = vpow.pop %v267
        %v269 = vmul.f32 %v258, 1.442695
        %v270 = vpow.pop %v269
        %v271 = vadd.f32 %v260, 1.0
        %v272 = vadd.f32 %v262, 1.0
        %v273 = vadd.f32 %v264, 1.0
        %v274 = vadd.f32 %v266, 1.0
        %v275 = vadd.f32 %v268, 1.0
        %v276 = vadd.f32 %v270, 1.0
        %v277 = vrcp.pop %v271
        %v278 = vrcp.pop %v272
        %v279 = vrcp.pop %v273
        %v280 = vrcp.pop %v274
        %v281 = vrcp.pop %v275
        %v282 = vrcp.pop %v276
        %vm283 = vcmp.gt.f32.partialorder %v247, 0.0
        %v284 = vsel %vm283, 1, 0
        %285 = vset.pattern.permute.xlu0 0
        %286 = vperm.xlu0 %285, %v284
        %v287 = vpop.permute.xlu0 %286
        %vm288 = vcmp.eq.s32.totalorder %v287, 1
        %v289 = vsel %vm288, %v260, %v277
        %v290 = vsel %vm288, %v262, %v278
        %v291 = vsel %vm288, %v264, %v279
        %v292 = vsel %vm288, %v266, %v280
        %v293 = vsel %vm288, %v268, %v281
        %v294 = vsel %vm288, %v270, %v282
        %v295 = vld [vmem:[%s3] sm:$0xff]
        %v296 = vld [vmem:[%s3 + $0x8] sm:$0xff]
        %v297 = vadd.f32 %v289, %v295
        %v298 = vadd.f32 %v290, %v296
        %v299 = vadd.f32 %v291, %v295
        %v300 = vadd.f32 %v292, %v296
        %v301 = vadd.f32 %v293, %v295
        %v302 = vadd.f32 %v294, %v296
        %v303 = vld [vmem:[%s238] sm:$0xff]
        %v304 = vld [vmem:[%s238 + $0x8] sm:$0xff]
        %v305 = vld [vmem:[%s238 + $0x10] sm:$0xff]
        %307 = vset.pattern.permute.xlu0 0
        %308 = vperm.xlu0 %307, %v303
        %v309 = vpop.permute.xlu0 %308
        %312 = vset.pattern.permute.xlu0 0
        %313 = vperm.xlu0 %312, %v304
        %v314 = vpop.permute.xlu0 %313
        %317 = vset.pattern.permute.xlu0 0
        %318 = vperm.xlu0 %317, %v305
        %v319 = vpop.permute.xlu0 %318
        %v321 = vmul.f32 %v297, %v309
        %v322 = vmul.f32 %v298, %v309
        %v323 = vmul.f32 %v299, %v314
        %v324 = vmul.f32 %v300, %v314
        %v325 = vmul.f32 %v301, %v319
        %v326 = vmul.f32 %v302, %v319
        %327 = vst [vmem:[%s232] sm:$0xff] %v321
        %328 = vst [vmem:[%s232 + $0x8] sm:$0xff] %v322
        %329 = vst [vmem:[%s232 + $0x10] sm:$0xff] %v323
        %330 = vst [vmem:[%s232 + $0x18] sm:$0xff] %v324
        %331 = vst [vmem:[%s232 + $0x20] sm:$0xff] %v325
        %332 = vst [vmem:[%s232 + $0x28] sm:$0xff] %v326
        %s333 = sand.u32 %s123, 1
        %s334 = scalar_lea.sflag [#allocation4], %s333
        %s335 = sand.u32 %s123, 1
        %s336 = smul.addr %s335, 48
        %s337 = scalar_lea.vmem [#allocation5], %s336
        // Predicated region
        $region41: #{tpu_custom_call.1} parent=35 // pred_check
          %p338 = pneg %p133
        $region42: #{tpu_custom_call.1} parent=35 // pred_check_branch
          %340 = sbr.rel (%p338) target = $region44
        $region43: #{tpu_custom_call.1} parent=35 // pred_region
          %s341 = smul.u32 3, %s21
          %s343 = ssub.s32 768, 768
          %344 = vsyncadd %s334, %s343
          %s345 = smul.addr %s341, 2
          %s346 = smul.addr %s345, 128
          %s347 = scalar_lea.hbm %s4, %s346
          %s348 = sshll.u32 %s337, 4
          %s349 = int_to_ptr.vmem [resolvable:$true] %s348
          %354 = dma.vmem_to_hbm [thread:$0]  %s349, 768, %s347, %s334, 256, 256, 16
        $region44: #{tpu_custom_call.1} parent=35 // pred_fallthru
          _
      $region36: #{tpu_custom_call.1} parent=5 // pred_fallthru
        _
      %p355 = scmp.le.s32.totalorder 2, %s16
      // Predicated region
      $region45: #{tpu_custom_call.1} parent=5 // pred_check
        %p356 = pneg %p355
      $region46: #{tpu_custom_call.1} parent=5 // pred_check_branch
        %358 = sbr.rel (%p356) target = $region48
      $region47: #{tpu_custom_call.1} parent=5 // pred_region
        %s359 = ssub.s32 %s16, 2
        // Predicated region
        $region49: #{tpu_custom_call.1} parent=47 // pred_check
          %p360 = pneg %p139
        $region50: #{tpu_custom_call.1} parent=47 // pred_check_branch
          %362 = sbr.rel (%p360) target = $region52
        $region51: #{tpu_custom_call.1} parent=47 // pred_region
          %s363 = sand.u32 %s124, 1
          %s364 = scalar_lea.sflag [#allocation4], %s363
          %s365 = sand.u32 %s124, 1
          %s366 = smul.addr %s365, 48
          %s367 = scalar_lea.vmem [#allocation5], %s366
          %368 = dma.done %s364, 768
        $region52: #{tpu_custom_call.1} parent=47 // pred_fallthru
          _
      $region48: #{tpu_custom_call.1} parent=5 // pred_fallthru
        _
    $region6: #{tpu_custom_call.1} parent=1 // loop_footer
      %s20 = sadd.s32 1, %s16
    $region7: #{tpu_custom_call.1} parent=1 // loop_footer_branch
      %15 = sbr.rel target = $region3
    $region8: #{tpu_custom_call.1} parent=1 // loop_exit
      _
    %369 = vsyncpa [#allocation3], 1
    %s370 = scalar_lea.sflag [#allocation3], 1
    %371 = vsyncpa %s370, 1
    %372 = vsyncpa [#allocation4], 1
    %s373 = scalar_lea.sflag [#allocation4], 1
    %374 = vsyncpa %s373, 1

</llo_original>
